<compile_context>
chip_gen: v5e
topology: v5e:2x2
jax: 0.10.0
libtpu: 0.0.40
codegen_flags: <defaults>
</compile_context>

<pallas_src>
import functools
import math

import jax
import jax.numpy as jnp
from jax.experimental import pallas as pl
from jax.experimental.pallas import tpu as pltpu


_K_COLLAPSE_MAX = 4096          # collapse the K grid axis when padded K <= this
_VMEM_CAP_BYTES = 48 * 1024 * 1024   # below v7x's 64 MiB physical VMEM per core


# --------------------------------------------------------------------------------------
# Pallas kernels
# --------------------------------------------------------------------------------------

def _mm_epilogue_kernel(x_ref, w_ref, s_ref, b_ref, o_ref, *, relu):
    """Single-shot (tm,K)@(K,tn) matmul + BN scale/bias (+ReLU) epilogue, f32 acc."""
    acc = jnp.dot(x_ref[...], w_ref[...], preferred_element_type=jnp.float32)
    y = acc * s_ref[...] + b_ref[...]            # f32 epilogue (v5e VPU: no bf16)
    if relu:
        y = jnp.maximum(y, 0.0)
    o_ref[...] = y.astype(o_ref.dtype)


def _mm_kgrid_kernel(x_ref, w_ref, s_ref, b_ref, o_ref, acc_ref, *, relu):
    """K-grid reduction fallback for large K: f32 VMEM accumulator, epilogue on last k."""
    k = pl.program_id(2)

    @pl.when(k == 0)
    def _():
        acc_ref[...] = jnp.zeros_like(acc_ref)

    acc_ref[...] += jnp.dot(x_ref[...], w_ref[...], preferred_element_type=jnp.float32)

    @pl.when(k == pl.num_programs(2) - 1)
    def _():
        y = acc_ref[...] * s_ref[...] + b_ref[...]
        if relu:
            y = jnp.maximum(y, 0.0)
        o_ref[...] = y.astype(o_ref.dtype)


# --------------------------------------------------------------------------------------
# Tiling / VMEM helpers
# --------------------------------------------------------------------------------------

def _cdiv(a, b):
    return -(-a // b)


def _round_up(x, m):
    return _cdiv(x, m) * m


def _choose_mn_tiles(M, N):
    """Lane-dense N tile, near-equal 8-aligned M tiles, >=2 blocks for v7x megacore."""
    Np = _round_up(N, 128)
    if Np % 512 == 0:
        tn = 512
    elif Np % 256 == 0:
        tn = 256
    else:
        tn = 128
    # M: split into near-equal tiles of at most 512 rows (minimises tail padding waste).
    m_blocks = _cdiv(M, 512)
    tm = _round_up(_cdiv(M, m_blocks), 8)
    # v7x has 2 TensorCores: make sure there are >= 2 "parallel" blocks to shard.
    if _cdiv(M, tm) * _cdiv(Np, tn) < 2 and tm >= 16:
        tm = _round_up(_cdiv(tm, 2), 8)
    return tm, tn


def _vmem_limit(footprint_bytes):
    # exact footprint + headroom; cap below the v7x physical VMEM.
    return int(min(_VMEM_CAP_BYTES, max(16 * 1024 * 1024, footprint_bytes + (4 << 20))))


def _footprint_collapsed(tm, tn, kp):
    # double-buffered bf16 x/w panels + f32 scale/bias rows + double-buffered f32 out tile
    return 2 * (tm * kp * 2 + kp * tn * 2 + 2 * tn * 4) + 2 * tm * tn * 4


def _footprint_kgrid(tm, tn, tk):
    return 2 * (tm * tk * 2 + tk * tn * 2 + 2 * tn * 4) + 2 * tm * tn * 4 + tm * tn * 4


# --------------------------------------------------------------------------------------
# Fused matmul + BN + ReLU wrappers
# --------------------------------------------------------------------------------------

def matmul_bn_act(x2d, w2d, scale, bias, *, apply_act):
    """x2d:(M,K) bf16, w2d:(K,N) bf16, scale/bias:(N,) f32 -> (M,N) f32."""
    M, K = x2d.shape
    K2, N = w2d.shape
    assert K == K2

    tm, tn = _choose_mn_tiles(M, N)
    Mp = _round_up(M, tm)
    Np = _round_up(N, tn)
    sp = jnp.pad(scale.astype(jnp.float32), (0, Np - N)).reshape(1, Np)
    bp = jnp.pad(bias.astype(jnp.float32), (0, Np - N)).reshape(1, Np)

    Kp = _round_up(K, 128)
    if Kp <= _K_COLLAPSE_MAX:
        # ---- collapsed-K path: x panel resident across the whole N sweep ----
        xp = jnp.pad(x2d.astype(jnp.bfloat16), ((0, Mp - M), (0, Kp - K)))
        wp = jnp.pad(w2d.astype(jnp.bfloat16), ((0, Kp - K), (0, Np - N)))
        grid = (Mp // tm, Np // tn)
        out = pl.pallas_call(
            functools.partial(_mm_epilogue_kernel, relu=apply_act),
            out_shape=jax.ShapeDtypeStruct((Mp, Np), jnp.float32),
            grid_spec=pltpu.PrefetchScalarGridSpec(
                num_scalar_prefetch=0,
                grid=grid,
                in_specs=[
                    pl.BlockSpec((tm, Kp), lambda i, j: (i, 0)),   # resident across j
                    pl.BlockSpec((Kp, tn), lambda i, j: (0, j)),
                    pl.BlockSpec((1, tn), lambda i, j: (0, j)),
                    pl.BlockSpec((1, tn), lambda i, j: (0, j)),
                ],
                out_specs=pl.BlockSpec((tm, tn), lambda i, j: (i, j)),
            ),
            compiler_params=pltpu.CompilerParams(
                dimension_semantics=("parallel", "arbitrary"),
                vmem_limit_bytes=_vmem_limit(_footprint_collapsed(tm, tn, Kp)),
            ),
        )(xp, wp, sp, bp)
    else:
        # ---- K-grid reduction fallback for large K ----
        tk = 512
        Kp = _round_up(K, tk)
        xp = jnp.pad(x2d.astype(jnp.bfloat16), ((0, Mp - M), (0, Kp - K)))
        wp = jnp.pad(w2d.astype(jnp.bfloat16), ((0, Kp - K), (0, Np - N)))
        grid = (Mp // tm, Np // tn, Kp // tk)
        out = pl.pallas_call(
            functools.partial(_mm_kgrid_kernel, relu=apply_act),
            out_shape=jax.ShapeDtypeStruct((Mp, Np), jnp.float32),
            grid_spec=pltpu.PrefetchScalarGridSpec(
                num_scalar_prefetch=0,
                grid=grid,
                in_specs=[
                    pl.BlockSpec((tm, tk), lambda i, j, k: (i, k)),
                    pl.BlockSpec((tk, tn), lambda i, j, k: (k, j)),
                    pl.BlockSpec((1, tn), lambda i, j, k: (0, j)),
                    pl.BlockSpec((1, tn), lambda i, j, k: (0, j)),
                ],
                out_specs=pl.BlockSpec((tm, tn), lambda i, j, k: (i, j)),
                scratch_shapes=[pltpu.VMEM((tm, tn), jnp.float32)],
            ),
            compiler_params=pltpu.CompilerParams(
                dimension_semantics=("parallel", "parallel", "arbitrary"),
                vmem_limit_bytes=_vmem_limit(_footprint_kgrid(tm, tn, tk)),
            ),
        )(xp, wp, sp, bp)

    return out[:M, :N]


def grouped_matmul_bn_act(xg, wg, scale_g, bias_g, *, apply_act):
    """Per-group matmuls via a group grid axis (no block-diagonal FLOP waste).

    xg:(G,M,Kg) bf16, wg:(G,Kg,Ng) bf16, scale_g/bias_g:(G,Ng) f32 -> (M, G*Ng) f32.
    """
    G, M, Kg = xg.shape
    _, _, Ng = wg.shape

    Kgp = _round_up(Kg, 128)
    tm, tn = _choose_mn_tiles(M, Ng)
    Mp = _round_up(M, tm)
    Ngp = _round_up(Ng, tn)

    xp = jnp.pad(xg.astype(jnp.bfloat16), ((0, 0), (0, Mp - M), (0, Kgp - Kg)))
    wp = jnp.pad(wg.astype(jnp.bfloat16), ((0, 0), (0, Kgp - Kg), (0, Ngp - Ng)))
    sp = jnp.pad(scale_g.astype(jnp.float32), ((0, 0), (0, Ngp - Ng))).reshape(G, 1, Ngp)
    bp = jnp.pad(bias_g.astype(jnp.float32), ((0, 0), (0, Ngp - Ng))).reshape(G, 1, Ngp)

    grid = (G, Mp // tm, Ngp // tn)
    out = pl.pallas_call(
        functools.partial(_mm_epilogue_kernel, relu=apply_act),
        out_shape=jax.ShapeDtypeStruct((G, Mp, Ngp), jnp.float32),
        grid_spec=pltpu.PrefetchScalarGridSpec(
            num_scalar_prefetch=0,
            grid=grid,
            in_specs=[
                pl.BlockSpec((None, tm, Kgp), lambda g, i, j: (g, i, 0)),
                pl.BlockSpec((None, Kgp, tn), lambda g, i, j: (g, 0, j)),
                pl.BlockSpec((None, 1, tn), lambda g, i, j: (g, 0, j)),
                pl.BlockSpec((None, 1, tn), lambda g, i, j: (g, 0, j)),
            ],
            out_specs=pl.BlockSpec((None, tm, tn), lambda g, i, j: (g, i, j)),
        ),
        compiler_params=pltpu.CompilerParams(
            dimension_semantics=("parallel", "parallel", "arbitrary"),
            vmem_limit_bytes=_vmem_limit(_footprint_collapsed(tm, tn, Kgp)),
        ),
    )(xp, wp, sp, bp)

    out = out[:, :M, :Ng]                                # (G, M, Ng)
    return jnp.transpose(out, (1, 0, 2)).reshape(M, G * Ng)


# --------------------------------------------------------------------------------------
# Glue: im2col (bf16), weight packing, BN folding
# --------------------------------------------------------------------------------------

def _im2col_patches(x_nhwc, KH, KW, stride, padding, dilation):
    """x:(N,H,W,C) -> patches:(N,Ho,Wo,KH*KW,C) (same dtype as x), plus Ho, Wo."""
    N, H, W, C = x_nhwc.shape
    d, s, p = dilation, stride, padding
    Ho = (H + 2 * p - d * (KH - 1) - 1) // s + 1
    Wo = (W + 2 * p - d * (KW - 1) - 1) // s + 1
    if KH == 1 and KW == 1 and p == 0:
        sl = x_nhwc[:, :(Ho - 1) * s + 1:s, :(Wo - 1) * s + 1:s, :]
        return sl.reshape(N, Ho, Wo, 1, C), Ho, Wo
    xp = jnp.pad(x_nhwc, ((0, 0), (p, p), (p, p), (0, 0)))
    cols = []
    for ih in range(KH):
        for iw in range(KW):
            cols.append(xp[:, ih * d:ih * d + (Ho - 1) * s + 1:s,
                           iw * d:iw * d + (Wo - 1) * s + 1:s, :])
    return jnp.stack(cols, axis=3), Ho, Wo


def _pack_weight_grouped(weight_bf16, groups):
    """(Cout, Cin/G, KH, KW) -> (G, KH*KW*cin_g, cout_g)."""
    cout, cin_g, KH, KW = weight_bf16.shape
    cout_g = cout // groups
    w = weight_bf16.reshape(groups, cout_g, cin_g, KH, KW)
    return jnp.transpose(w, (0, 3, 4, 2, 1)).reshape(groups, KH * KW * cin_g, cout_g)


def _block_diag(wg):
    """(G, Kg, Ng) -> dense block-diagonal (G*Kg, G*Ng), dtype-preserving."""
    G, Kg, Ng = wg.shape
    out = jnp.zeros((G * Kg, G * Ng), wg.dtype)
    for g in range(G):
        out = out.at[g * Kg:(g + 1) * Kg, g * Ng:(g + 1) * Ng].set(wg[g])
    return out


def _fold_bn(gamma, beta, mean, var, eps, conv_bias=None):
    """Eval-mode BatchNorm (+ optional conv bias) folded into per-channel scale/bias."""
    scale = gamma / jnp.sqrt(var + eps)
    bias = beta - mean * scale
    if conv_bias is not None:
        bias = bias + conv_bias * scale
    return scale, bias


# --------------------------------------------------------------------------------------
# ConvBnAct module (init + forward)
# --------------------------------------------------------------------------------------

class KeyGen:
    def __init__(self, key):
        self.key = key

    def __call__(self):
        self.key, k = jax.random.split(self.key)
        return k


def init_conv_bn_act(kg, in_channels, out_channels, kernel_size=1, stride=1, padding=0,
                     dilation=1, groups=1, bias=False, apply_act=True):
    cin_g = in_channels // groups
    fan_in = cin_g * kernel_size * kernel_size
    weight = jax.random.normal(kg(), (out_channels, cin_g, kernel_size, kernel_size),
                               jnp.float32) / math.sqrt(float(fan_in))
    conv_bias = (0.01 * jax.random.normal(kg(), (out_channels,), jnp.float32)) if bias else None
    gamma = 1.0 + 0.1 * jax.random.normal(kg(), (out_channels,), jnp.float32)
    beta = 0.1 * jax.random.normal(kg(), (out_channels,), jnp.float32)
    mean = 0.1 * jax.random.normal(kg(), (out_channels,), jnp.float32)
    var = 0.9 + 0.2 * jax.random.uniform(kg(), (out_channels,), jnp.float32)
    return {
        'weight': weight, 'conv_bias': conv_bias,
        'gamma': gamma, 'beta': beta, 'mean': mean, 'var': var, 'eps': 1e-5,
        'kernel_size': kernel_size, 'stride': stride, 'padding': padding,
        'dilation': dilation, 'groups': groups, 'apply_act': apply_act,
        'in_channels': in_channels, 'out_channels': out_channels,
    }


def conv_bn_act_forward(x_nchw, p):
    """Accepts NCHW f32 like the PyTorch module; returns NCHW f32."""
    Nb, C, H, W = x_nchw.shape
    k = p['kernel_size']
    G = p['groups']
    cout = p['out_channels']
    cout_g = cout // G
    cin_g = C // G
    KK = k * k

    # bf16 BEFORE im2col so the (possibly KH*KW-amplified) patches tensor lives in bf16.
    x = jnp.transpose(x_nchw.astype(jnp.bfloat16), (0, 2, 3, 1))          # NHWC bf16
    patches, Ho, Wo = _im2col_patches(x, k, k, p['stride'], p['padding'], p['dilation'])
    M = Nb * Ho * Wo

    scale, bias = _fold_bn(p['gamma'], p['beta'], p['mean'], p['var'], p['eps'], p['conv_bias'])
    w_bf16 = p['weight'].astype(jnp.bfloat16)

    use_group_grid = (G > 1 and cout_g % 128 == 0
                      and _round_up(KK * cin_g, 128) <= _K_COLLAPSE_MAX)

    if use_group_grid:
        # group grid axis: only the real per-group FLOPs, lane-dense cout_g tiles
        xg = patches.reshape(Nb, Ho, Wo, KK, G, cin_g)
        xg = jnp.transpose(xg, (4, 0, 1, 2, 3, 5)).reshape(G, M, KK * cin_g)
        wg = _pack_weight_grouped(w_bf16, G)                              # (G, Kg, cout_g)
        y = grouped_matmul_bn_act(xg, wg, scale.reshape(G, cout_g), bias.reshape(G, cout_g),
                                  apply_act=p['apply_act'])
    else:
        if G == 1:
            x2d = patches.reshape(M, KK * C)
            w2d = jnp.transpose(w_bf16, (2, 3, 1, 0)).reshape(KK * C, cout)
        else:
            # small cout_g: block-diagonal dense packing keeps lane-dense unmasked stores
            xg = patches.reshape(Nb, Ho, Wo, KK, G, cin_g)
            x2d = jnp.transpose(xg, (0, 1, 2, 4, 3, 5)).reshape(M, G * KK * cin_g)
            w2d = _block_diag(_pack_weight_grouped(w_bf16, G))
        y = matmul_bn_act(x2d, w2d, scale, bias, apply_act=p['apply_act'])

    y = y.reshape(Nb, Ho, Wo, cout)
    return jnp.transpose(y, (0, 3, 1, 2)).astype(jnp.float32)             # back to NCHW


# --------------------------------------------------------------------------------------
# Pure-JAX reference (same bf16 cast of conv inputs, f32 accumulation) for verification
# --------------------------------------------------------------------------------------

def conv_bn_act_reference(x_nchw, p):
    y = jax.lax.conv_general_dilated(
        x_nchw.astype(jnp.bfloat16), p['weight'].astype(jnp.bfloat16),
        window_strides=(p['stride'], p['stride']),
        padding=[(p['padding'], p['padding']), (p['padding'], p['padding'])],
        rhs_dilation=(p['dilation'], p['dilation']),
        dimension_numbers=('NCHW', 'OIHW', 'NCHW'),
        feature_group_count=p['groups'],
        preferred_element_type=jnp.float32)
    if p['conv_bias'] is not None:
        y = y + p['conv_bias'].reshape(1, -1, 1, 1)
    scale = (p['gamma'] / jnp.sqrt(p['var'] + p['eps'])).reshape(1, -1, 1, 1)
    y = (y - p['mean'].reshape(1, -1, 1, 1)) * scale + p['beta'].reshape(1, -1, 1, 1)
    if p['apply_act']:
        y = jnp.maximum(y, 0.0)
    return y


# --------------------------------------------------------------------------------------
# Main
# --------------------------------------------------------------------------------------

if __name__ == "__main__":
    key = jax.random.PRNGKey(0)
    kp, kx1, kx2, kx3 = jax.random.split(key, 4)
    kg = KeyGen(kp)

    x_a = jax.random.normal(kx1, (2, 32, 16, 16), jnp.float32)    # NCHW, like PyTorch
    x_b = jax.random.normal(kx2, (2, 256, 16, 16), jnp.float32)
    x_c = jax.random.normal(kx3, (1, 512, 8, 8), jnp.float32)

    cases = [
        # 1x1 pointwise conv + BN + ReLU (typical ConvBnAct use) -> collapsed-K kernel
        (x_a, init_conv_bn_act(kg, 32, 64, kernel_size=1), (2, 64, 16, 16)),
        # 3x3 stride-2 conv + BN + ReLU -> collapsed-K kernel
        (x_a, init_conv_bn_act(kg, 32, 48, kernel_size=3, stride=2, padding=1), (2, 48, 8, 8)),
        # grouped, dilated 3x3 conv with bias, BN, no act (cout_g < 128 -> block-diag path)
        (x_a, init_conv_bn_act(kg, 32, 32, kernel_size=3, stride=1, padding=2,
                               dilation=2, groups=2, bias=True, apply_act=False),
         (2, 32, 16, 16)),
        # grouped 1x1 with cout_g = 128 -> group grid-axis kernel (no block-diag waste)
        (x_b, init_conv_bn_act(kg, 256, 256, kernel_size=1, groups=2), (2, 256, 16, 16)),
        # K = 9*512 = 4608 > 4096 -> K-grid reduction kernel with f32 acc scratch
        (x_c, init_conv_bn_act(kg, 512, 128, kernel_size=3, padding=1), (1, 128, 8, 8)),
    ]

    ok = True
    for x, cfg, exp_shape in cases:
        out = jax.block_until_ready(conv_bn_act_forward(x, cfg))
        ref = jax.block_until_ready(conv_bn_act_reference(x, cfg))
        assert out.shape == exp_shape, (out.shape, exp_shape)
        assert bool(jnp.all(jnp.isfinite(out)))
        err = float(jnp.max(jnp.abs(out - ref)))
        ok = ok and (err < 2e-2)

    print("KERNEL_OK" if ok else "KERNEL_MISMATCH")
</pallas_src>

<mosaic_0001>
module attributes {stable_mosaic.version = 11 : i64} {
  func.func @_mm_epilogue_kernel(%arg0: i32, %arg1: i32, %arg2: memref<256x128xbf16, #tpu.memory_space<vmem>>, %arg3: memref<128x128xbf16, #tpu.memory_space<vmem>>, %arg4: memref<1x128xf32, #tpu.memory_space<vmem>>, %arg5: memref<1x128xf32, #tpu.memory_space<vmem>>, %arg6: memref<256x128xf32, #tpu.memory_space<vmem>>) attributes {dimension_semantics = [#tpu.dimension_semantics<parallel>, #tpu.dimension_semantics<arbitrary>], iteration_bounds = array<i64: 2, 1>, scalar_prefetch = 0 : i64, scratch_operands = 0 : i64, tpu.core_type = #tpu.core_type<tc>, window_params = [{transform_indices = @transform_0, window_bounds = array<i64: 256, 128>}, {transform_indices = @transform_1, window_bounds = array<i64: 128, 128>}, {transform_indices = @transform_2, window_bounds = array<i64: 1, 128>}, {transform_indices = @transform_3, window_bounds = array<i64: 1, 128>}, {transform_indices = @transform_4, window_bounds = array<i64: 256, 128>}]} {
    %c0 = arith.constant 0 : index
    %c0_0 = arith.constant 0 : index
    %0 = vector.load %arg2[%c0, %c0_0] : memref<256x128xbf16, #tpu.memory_space<vmem>>, vector<256x128xbf16>
    %c0_1 = arith.constant 0 : index
    %c0_2 = arith.constant 0 : index
    %1 = vector.load %arg3[%c0_1, %c0_2] : memref<128x128xbf16, #tpu.memory_space<vmem>>, vector<128x128xbf16>
    %cst = arith.constant dense<0.000000e+00> : vector<256x128xf32>
    %2 = tpu.matmul %0, %1, %cst {dimension_numbers = #tpu.dot_dimension_numbers<[1], [0], [0], [1], [0, 0, 1, 1], [], []>} : vector<256x128xbf16>, vector<128x128xbf16>, vector<256x128xf32> -> vector<256x128xf32>
    %c0_3 = arith.constant 0 : index
    %c0_4 = arith.constant 0 : index
    %3 = vector.load %arg4[%c0_3, %c0_4] : memref<1x128xf32, #tpu.memory_space<vmem>>, vector<1x128xf32>
    %4 = vector.broadcast %3 : vector<1x128xf32> to vector<256x128xf32>
    %5 = arith.mulf %2, %4 : vector<256x128xf32>
    %c0_5 = arith.constant 0 : index
    %c0_6 = arith.constant 0 : index
    %6 = vector.load %arg5[%c0_5, %c0_6] : memref<1x128xf32, #tpu.memory_space<vmem>>, vector<1x128xf32>
    %7 = vector.broadcast %6 : vector<1x128xf32> to vector<256x128xf32>
    %8 = arith.addf %5, %7 : vector<256x128xf32>
    %cst_7 = arith.constant 0.000000e+00 : f32
    %9 = vector.broadcast %cst_7 : f32 to vector<256x128xf32>
    %10 = arith.maximumf %8, %9 : vector<256x128xf32>
    %c0_8 = arith.constant 0 : index
    %c0_9 = arith.constant 0 : index
    %11 = vector.load %arg6[%c0_8, %c0_9] : memref<256x128xf32, #tpu.memory_space<vmem>>, vector<256x128xf32>
    tpu.vector_store %arg6[%c0_8, %c0_9], %10 {strides = array<i32>} : memref<256x128xf32, #tpu.memory_space<vmem>>, vector<256x128xf32>,
    return
  }
  func.func @transform_0(%arg0: i32, %arg1: i32) -> (i32, i32) {
    %c0_i32 = arith.constant 0 : i32
    %c0_i32_0 = arith.constant 0 : i32
    return %arg0, %c0_i32 : i32, i32
  }
  func.func @transform_1(%arg0: i32, %arg1: i32) -> (i32, i32) {
    %c0_i32 = arith.constant 0 : i32
    %c0_i32_0 = arith.constant 0 : i32
    return %c0_i32, %arg1 : i32, i32
  }
  func.func @transform_2(%arg0: i32, %arg1: i32) -> (i32, i32) {
    %c0_i32 = arith.constant 0 : i32
    %c0_i32_0 = arith.constant 0 : i32
    return %c0_i32, %arg1 : i32, i32
  }
  func.func @transform_3(%arg0: i32, %arg1: i32) -> (i32, i32) {
    %c0_i32 = arith.constant 0 : i32
    %c0_i32_0 = arith.constant 0 : i32
    return %c0_i32, %arg1 : i32, i32
  }
  func.func @transform_4(%arg0: i32, %arg1: i32) -> (i32, i32) {
    %c0_i32 = arith.constant 0 : i32
    return %arg0, %arg1 : i32, i32
  }
}

</mosaic_0001>

<llo_original>
// kernel: tpu_custom_call.1
$region0: #{tpu_custom_call.1}
  #allocation0 [shape = 'u32[]', space=smem, size = 0x4, offset = 0x4, fixed_abs, tag = 'smem constant byte address 0x4 - core index']
  #allocation1 [shape = 'u32[72,128]{1,0:T(1,128)}', space=vmem, size = 0x9000, scoped, tag = 'internal scratch']
  %s0 = inlined_call_operand.hbm [shape: bf16[512,128], index: 0, kind: input, shape index: {}]
  %s1 = inlined_call_operand.hbm [shape: bf16[128,128], index: 1, kind: input, shape index: {}]
  %s2 = inlined_call_operand.vmem [shape: f32[1,128], index: 2, kind: input, shape index: {}]
  %s3 = inlined_call_operand.vmem [shape: f32[1,128], index: 3, kind: input, shape index: {}]
  %s4 = inlined_call_operand.hbm [shape: f32[512,128], index: 4, kind: output, shape index: {}]
  %s5 = sld [smem:[#allocation0]]
  $region57: #{tpu_custom_call.1} parent=0
    _
  %s7 = ssub.s32 1, %s5
  %s8 = scalar_select 0, %s7, %s5
  $region1: #{tpu_custom_call.1} parent=0
    #allocation2 [shape = 'u8[131072]{0}', space=vmem, size = 0x20000, scoped, tag = 'input window, operand 0']
    #allocation3 [shape = 's32[2]{0}', space=sflag, size = 0x8, scoped, tag = 'scoped memory for tpu_custom_call.1']
    #allocation4 [shape = 's32[2]{0}', space=sflag, size = 0x8, scoped, tag = 'scoped memory for tpu_custom_call.1']
    #allocation5 [shape = 'u8[32768]{0}', space=vmem, size = 0x8000, scoped, tag = 'input window, operand 1, single buffered']
    #allocation6 [shape = 's32[1]{0}', space=sflag, size = 0x4, scoped, tag = 'scoped memory for tpu_custom_call.1']
    #allocation7 [shape = 'u8[262144]{0}', space=vmem, size = 0x40000, scoped, tag = 'output window, operand 0']
    %9 = vsyncpa [#allocation3], 0
    %s10 = scalar_lea.sflag [#allocation3], 1
    %11 = vsyncpa %s10, 0
    %12 = vsyncpa [#allocation6], 0
    %13 = vsyncpa [#allocation4], 0
    %s14 = scalar_lea.sflag [#allocation4], 1
    %15 = vsyncpa %s14, 0
    loop: start=0, step=1, limit=4
    $region2: #{tpu_custom_call.1} parent=1 // loop_pre_header
      _
    $region3: #{tpu_custom_call.1} parent=1 // loop_header
      %s17 = sphi 0, %s21
      %p18 = scmp.ge.s32.totalorder %s17, 4
      %s24 = sphi 0, %s36
      %s25 = sphi 0, %s32
      %s26 = sphi 0, %s24
      %s27 = sphi 0, %s25
      %s28 = sphi 0, %s26
      %s29 = sphi 0, %s27
      %s39 = sphi 0, %s41
      %s42 = sphi 0, %s39
      %s43 = sphi 0, %s42
      %s59 = sphi 0, %s43
      %s65 = sphi 0, %s67
      %s68 = sphi 0, %s65
      %s69 = sphi 0, %s68
      %s85 = sphi 0, %s69
      %s91 = sphi 0, %s93
      %s94 = sphi 0, %s91
      %s95 = sphi 0, %s94
      %s111 = sphi 0, %s95
      %s117 = sphi 0, %s119
      %s120 = sphi 0, %s117
      %s121 = sphi 0, %s120
      %s137 = sphi 0, %s121
      %s145 = sphi 0, %s147
      %s148 = sphi 0, %s145
      %s149 = sphi 0, %s148
      %s165 = sphi 0, %s149
    $region4: #{tpu_custom_call.1} parent=1 // loop_header_branch
      %20 = sbr.rel (%p18) target = $region8
    $region5: #{tpu_custom_call.1} parent=1 // loop_body
      %s22 = ssub.s32 %s17, 1
      %s23 = ssub.s32 %s17, 2
      %s30 = sadd.s32 1, %s25
      %p31 = scmp.ge.s32.totalorder %s30, 1
      %s32 = scalar_select %p31, 0, %s30
      %s33 = sadd.s32 1, %s24
      %s34 = scalar_select %p31, %s33, %s24
      %p35 = scmp.ge.s32.totalorder %s34, 2
      %s36 = scalar_select %p35, 0, %s34
      %s37 = ssub.s32 %s24, %s36
      %p38 = scmp.eq.s32.totalorder %s37, 0
      %s40 = sadd.s32 %s39, 1
      %s41 = scalar_select %p38, %s39, %s40
      %p44 = pneg %p38
      %p45 = scmp.eq.s32.totalorder %s17, 1
      %p46 = por %p44, %p45
      %p47 = scmp.ne.s32.totalorder %s39, %s42
      %p48 = scmp.eq.s32.totalorder %s17, 0
      %p49 = por %p47, %p48
      %p50 = scmp.ne.s32.totalorder %s39, %s42
      %p51 = scmp.eq.s32.totalorder %s22, 1
      %p52 = por %p50, %p51
      %p53 = scmp.ne.s32.totalorder %s42, %s43
      %p54 = scmp.eq.s32.totalorder %s22, 0
      %p55 = por %p53, %p54
      %p56 = scmp.ne.s32.totalorder %s42, %s43
      %p57 = scmp.eq.s32.totalorder %s23, 1
      %p58 = por %p56, %p57
      %p60 = scmp.ne.s32.totalorder %s43, %s59
      %p61 = scmp.eq.s32.totalorder %s23, 0
      %p62 = por %p60, %p61
      %s63 = ssub.s32 %s25, %s32
      %p64 = scmp.eq.s32.totalorder %s63, 0
      %s66 = sadd.s32 %s65, 1
      %s67 = scalar_select %p64, %s65, %s66
      %p70 = pneg %p64
      %p71 = scmp.eq.s32.totalorder %s17, 1
      %p72 = por %p70, %p71
      %p73 = scmp.ne.s32.totalorder %s65, %s68
      %p74 = scmp.eq.s32.totalorder %s17, 0
      %p75 = por %p73, %p74
      %p76 = scmp.ne.s32.totalorder %s65, %s68
      %p77 = scmp.eq.s32.totalorder %s22, 1
      %p78 = por %p76, %p77
      %p79 = scmp.ne.s32.totalorder %s68, %s69
      %p80 = scmp.eq.s32.totalorder %s22, 0
      %p81 = por %p79, %p80
      %p82 = scmp.ne.s32.totalorder %s68, %s69
      %p83 = scmp.eq.s32.totalorder %s23, 1
      %p84 = por %p82, %p83
      %p86 = scmp.ne.s32.totalorder %s69, %s85
      %p87 = scmp.eq.s32.totalorder %s23, 0
      %p88 = por %p86, %p87
      %s89 = ssub.s32 %s25, %s32
      %p90 = scmp.eq.s32.totalorder %s89, 0
      %s92 = sadd.s32 %s91, 1
      %s93 = scalar_select %p90, %s91, %s92
      %p96 = pneg %p90
      %p97 = scmp.eq.s32.totalorder %s17, 1
      %p98 = por %p96, %p97
      %p99 = scmp.ne.s32.totalorder %s91, %s94
      %p100 = scmp.eq.s32.totalorder %s17, 0
      %p101 = por %p99, %p100
      %p102 = scmp.ne.s32.totalorder %s91, %s94
      %p103 = scmp.eq.s32.totalorder %s22, 1
      %p104 = por %p102, %p103
      %p105 = scmp.ne.s32.totalorder %s94, %s95
      %p106 = scmp.eq.s32.totalorder %s22, 0
      %p107 = por %p105, %p106
      %p108 = scmp.ne.s32.totalorder %s94, %s95
      %p109 = scmp.eq.s32.totalorder %s23, 1
      %p110 = por %p108, %p109
      %p112 = scmp.ne.s32.totalorder %s95, %s111
      %p113 = scmp.eq.s32.totalorder %s23, 0
      %p114 = por %p112, %p113
      %s115 = ssub.s32 %s25, %s32
      %p116 = scmp.eq.s32.totalorder %s115, 0
      %s118 = sadd.s32 %s117, 1
      %s119 = scalar_select %p116, %s117, %s118
      %p122 = pneg %p116
      %p123 = scmp.eq.s32.totalorder %s17, 1
      %p124 = por %p122, %p123
      %p125 = scmp.ne.s32.totalorder %s117, %s120
      %p126 = scmp.eq.s32.totalorder %s17, 0
      %p127 = por %p125, %p126
      %p128 = scmp.ne.s32.totalorder %s117, %s120
      %p129 = scmp.eq.s32.totalorder %s22, 1
      %p130 = por %p128, %p129
      %p131 = scmp.ne.s32.totalorder %s120, %s121
      %p132 = scmp.eq.s32.totalorder %s22, 0
      %p133 = por %p131, %p132
      %p134 = scmp.ne.s32.totalorder %s120, %s121
      %p135 = scmp.eq.s32.totalorder %s23, 1
      %p136 = por %p134, %p135
      %p138 = scmp.ne.s32.totalorder %s121, %s137
      %p139 = scmp.eq.s32.totalorder %s23, 0
      %p140 = por %p138, %p139
      %s141 = ssub.s32 %s24, %s36
      %s142 = ssub.s32 %s25, %s32
      %s143 = sor.u32 %s141, %s142
      %p144 = scmp.eq.s32.totalorder %s143, 0
      %s146 = sadd.s32 %s145, 1
      %s147 = scalar_select %p144, %s145, %s146
      %p150 = pneg %p144
      %p151 = scmp.eq.s32.totalorder %s17, 1
      %p152 = por %p150, %p151
      %p153 = scmp.ne.s32.totalorder %s145, %s148
      %p154 = scmp.eq.s32.totalorder %s17, 0
      %p155 = por %p153, %p154
      %p156 = scmp.ne.s32.totalorder %s145, %s148
      %p157 = scmp.eq.s32.totalorder %s22, 1
      %p158 = por %p156, %p157
      %p159 = scmp.ne.s32.totalorder %s148, %s149
      %p160 = scmp.eq.s32.totalorder %s22, 0
      %p161 = por %p159, %p160
      %p162 = scmp.ne.s32.totalorder %s148, %s149
      %p163 = scmp.eq.s32.totalorder %s23, 1
      %p164 = por %p162, %p163
      %p166 = scmp.ne.s32.totalorder %s149, %s165
      %p167 = scmp.eq.s32.totalorder %s23, 0
      %p168 = por %p166, %p167
      %p169 = scmp.le.s32.totalorder 1, %s17
      %p170 = scmp.lt.s32.totalorder %s17, 3
      %p171 = pnand %p169, %p170
      %p172 = pneg %p171
      // Predicated region
      $region9: #{tpu_custom_call.1} parent=5 // pred_check
        _
      $region10: #{tpu_custom_call.1} parent=5 // pred_check_branch
        %174 = sbr.rel (%p171) target = $region12
      $region11: #{tpu_custom_call.1} parent=5 // pred_region
        %s175 = ssub.s32 %s17, 1
        // Predicated region
        $region13: #{tpu_custom_call.1} parent=11 // pred_check
          %p176 = pneg %p81
        $region14: #{tpu_custom_call.1} parent=11 // pred_check_branch
          %178 = sbr.rel (%p176) target = $region16
        $region15: #{tpu_custom_call.1} parent=11 // pred_region
          %180 = vsyncadd [#allocation6], 0
          %s181 = smul.addr %s27, 4
          %s182 = scalar_lea.hbm %s1, %s181
          %s183 = sshll.u32 %s182, 4
          %s184 = int_to_ptr.hbm [resolvable:$true] %s183
          %s185 = sshll.u32 [#allocation5], 4
          %s186 = int_to_ptr.vmem [resolvable:$true] %s185
          %191 = dma.hbm_to_vmem [thread:$0]  %s184, 1024, %s186, [#allocation6], 64, 64, 4
        $region16: #{tpu_custom_call.1} parent=11 // pred_fallthru
          _
        // Predicated region
        $region17: #{tpu_custom_call.1} parent=11 // pred_check
          %p192 = pneg %p107
        $region18: #{tpu_custom_call.1} parent=11 // pred_check_branch
          %194 = sbr.rel (%p192) target = $region20
        $region19: #{tpu_custom_call.1} parent=11 // pred_region
          %p195 = scmp.lt.s32.totalorder %s27, 0
          %s196 = scalar_select %p195, %s27, 0
          %s197 = scalar_lea.vmem %s2, %s196
        $region20: #{tpu_custom_call.1} parent=11 // pred_fallthru
          _
        // Predicated region
        $region21: #{tpu_custom_call.1} parent=11 // pred_check
          %p198 = pneg %p133
        $region22: #{tpu_custom_call.1} parent=11 // pred_check_branch
          %200 = sbr.rel (%p198) target = $region24
        $region23: #{tpu_custom_call.1} parent=11 // pred_region
          %p201 = scmp.lt.s32.totalorder %s27, 0
          %s202 = scalar_select %p201, %s27, 0
          %s203 = scalar_lea.vmem %s3, %s202
        $region24: #{tpu_custom_call.1} parent=11 // pred_fallthru
          _
      $region12: #{tpu_custom_call.1} parent=5 // pred_fallthru
        _
      %p204 = scmp.lt.s32.totalorder %s17, 2
      // Predicated region
      $region25: #{tpu_custom_call.1} parent=5 // pred_check
        %p205 = pneg %p204
      $region26: #{tpu_custom_call.1} parent=5 // pred_check_branch
        %207 = sbr.rel (%p205) target = $region28
      $region27: #{tpu_custom_call.1} parent=5 // pred_region
        // Predicated region
        $region29: #{tpu_custom_call.1} parent=27 // pred_check
          %p208 = pneg %p49
        $region30: #{tpu_custom_call.1} parent=27 // pred_check_branch
          %210 = sbr.rel (%p208) target = $region32
        $region31: #{tpu_custom_call.1} parent=27 // pred_region
          %s211 = sand.u32 %s39, 1
          %s212 = scalar_lea.sflag [#allocation3], %s211
          %s213 = sand.u32 %s39, 1
          %s214 = smul.addr %s213, 128
          %s215 = scalar_lea.vmem [#allocation2], %s214
          %s216 = smul.u32 32, %s24
          %218 = vsyncadd %s212, 0
          %s219 = smul.addr %s216, 4
          %s220 = scalar_lea.hbm %s0, %s219
          %s221 = sshll.u32 %s220, 4
          %s222 = int_to_ptr.hbm [resolvable:$true] %s221
          %s223 = sshll.u32 %s215, 4
          %s224 = int_to_ptr.vmem [resolvable:$true] %s223
          %229 = dma.hbm_to_vmem [thread:$0]  %s222, 2048, %s224, %s212, 64, 64, 4
        $region32: #{tpu_custom_call.1} parent=27 // pred_fallthru
          _
      $region28: #{tpu_custom_call.1} parent=5 // pred_fallthru
        _
      %p230 = scmp.le.s32.totalorder 1, %s17
      %p231 = scmp.lt.s32.totalorder %s17, 3
      %p232 = pnand %p230, %p231
      %p233 = pneg %p232
      // Predicated region
      $region33: #{tpu_custom_call.1} parent=5 // pred_check
        _
      $region34: #{tpu_custom_call.1} parent=5 // pred_check_branch
        %235 = sbr.rel (%p232) target = $region36
      $region35: #{tpu_custom_call.1} parent=5 // pred_region
        %s236 = ssub.s32 %s17, 1
        %s237 = sand.u32 %s42, 1
        %s238 = scalar_lea.sflag [#allocation3], %s237
        %s239 = sand.u32 %s42, 1
        %s240 = smul.addr %s239, 128
        %s241 = scalar_lea.vmem [#allocation2], %s240
        // Predicated region
        $region37: #{tpu_custom_call.1} parent=35 // pred_check
          %p242 = pneg %p55
        $region38: #{tpu_custom_call.1} parent=35 // pred_check_branch
          %244 = sbr.rel (%p242) target = $region40
        $region39: #{tpu_custom_call.1} parent=35 // pred_region
          %246 = dma.done %s238, 2048
        $region40: #{tpu_custom_call.1} parent=35 // pred_fallthru
          _
        // Predicated region
        $region41: #{tpu_custom_call.1} parent=35 // pred_check
          %p247 = pneg %p81
        $region42: #{tpu_custom_call.1} parent=35 // pred_check_branch
          %249 = sbr.rel (%p247) target = $region44
        $region43: #{tpu_custom_call.1} parent=35 // pred_region
          %251 = dma.done [#allocation6], 1024
        $region44: #{tpu_custom_call.1} parent=35 // pred_fallthru
          _
        %s252 = sand.u32 %s42, 1
        %s253 = scalar_lea.sflag [#allocation3], %s252
        %s254 = sand.u32 %s42, 1
        %s255 = smul.addr %s254, 128
        %s256 = scalar_lea.vmem [#allocation2], %s255
        %p257 = pneg %p55
        %p258 = pneg %p52
        %p259 = pneg %p81
        %p260 = pneg %p78
        %p261 = scmp.lt.s32.totalorder %s27, 0
        %s262 = scalar_select %p261, %s27, 0
        %s263 = scalar_lea.vmem %s2, %s262
        %p264 = pneg %p107
        %p265 = pneg %p104
        %p266 = scmp.lt.s32.totalorder %s27, 0
        %s267 = scalar_select %p266, %s27, 0
        %s268 = scalar_lea.vmem %s3, %s267
        %p269 = pneg %p133
        %p270 = pneg %p130
        %p271 = pneg %p161
        %p272 = pneg %p158
        %s273 = sand.u32 %s148, 1
        %s274 = scalar_lea.sflag [#allocation4], %s273
        %s275 = sand.u32 %s148, 1
        %s276 = smul.addr %s275, 256
        %s277 = scalar_lea.vmem [#allocation7], %s276
        %s278 = smul.u32 32, %s26
        %p279 = scmp.lt.s32.totalorder %s27, 0
        %s280 = scalar_select %p279, %s27, 0
        %s281 = scalar_lea.vmem %s2, %s280
        %p282 = scmp.lt.s32.totalorder %s27, 0
        %s283 = scalar_select %p282, %s27, 0
        %s284 = scalar_lea.vmem %s3, %s283
        %s285 = smul.u32 32, %s26
        %v286 = vld [vmem:[%s241] sm:$0xf]
        %v287 = vld [vmem:[%s241 + $0x4] sm:$0xf]
        %v288 = vld [vmem:[%s241 + $0x8] sm:$0xf]
        %v289 = vld [vmem:[%s241 + $0xc] sm:$0xf]
        %v290 = vld [vmem:[%s241 + $0x10] sm:$0xf]
        %v291 = vld [vmem:[%s241 + $0x14] sm:$0xf]
        %v292 = vld [vmem:[%s241 + $0x18] sm:$0xf]
        %v293 = vld [vmem:[%s241 + $0x1c] sm:$0xf]
        %v294 = vld [vmem:[%s241 + $0x20] sm:$0xf]
        %v295 = vld [vmem:[%s241 + $0x24] sm:$0xf]
        %v296 = vld [vmem:[%s241 + $0x28] sm:$0xf]
        %v297 = vld [vmem:[%s241 + $0x2c] sm:$0xf]
        %v298 = vld [vmem:[%s241 + $0x30] sm:$0xf]
        %v299 = vld [vmem:[%s241 + $0x34] sm:$0xf]
        %v300 = vld [vmem:[%s241 + $0x38] sm:$0xf]
        %v301 = vld [vmem:[%s241 + $0x3c] sm:$0xf]
        %v302 = vld [vmem:[%s241 + $0x40] sm:$0xf]
        %v303 = vld [vmem:[%s241 + $0x44] sm:$0xf]
        %v304 = vld [vmem:[%s241 + $0x48] sm:$0xf]
        %v305 = vld [vmem:[%s241 + $0x4c] sm:$0xf]
        %v306 = vld [vmem:[%s241 + $0x50] sm:$0xf]
        %v307 = vld [vmem:[%s241 + $0x54] sm:$0xf]
        %v308 = vld [vmem:[%s241 + $0x58] sm:$0xf]
        %v309 = vld [vmem:[%s241 + $0x5c] sm:$0xf]
        %v310 = vld [vmem:[%s241 + $0x60] sm:$0xf]
        %v311 = vld [vmem:[%s241 + $0x64] sm:$0xf]
        %v312 = vld [vmem:[%s241 + $0x68] sm:$0xf]
        %v313 = vld [vmem:[%s241 + $0x6c] sm:$0xf]
        %v314 = vld [vmem:[%s241 + $0x70] sm:$0xf]
        %v315 = vld [vmem:[%s241 + $0x74] sm:$0xf]
        %v316 = vld [vmem:[%s241 + $0x78] sm:$0xf]
        %v317 = vld [vmem:[%s241 + $0x7c] sm:$0xf]
        %v318 = vld [vmem:[#allocation5] sm:$0xf]
        %v319 = vld [vmem:[#allocation5 + $0x4] sm:$0xf]
        %v320 = vld [vmem:[#allocation5 + $0x8] sm:$0xf]
        %v321 = vld [vmem:[#allocation5 + $0xc] sm:$0xf]
        %v322 = vld [vmem:[#allocation5 + $0x10] sm:$0xf]
        %v323 = vld [vmem:[#allocation5 + $0x14] sm:$0xf]
        %v324 = vld [vmem:[#allocation5 + $0x18] sm:$0xf]
        %v325 = vld [vmem:[#allocation5 + $0x1c] sm:$0xf]
        %v326 = vld [vmem:[#allocation5 + $0x20] sm:$0xf]
        %v327 = vld [vmem:[#allocation5 + $0x24] sm:$0xf]
        %v328 = vld [vmem:[#allocation5 + $0x28] sm:$0xf]
        %v329 = vld [vmem:[#allocation5 + $0x2c] sm:$0xf]
        %v330 = vld [vmem:[#allocation5 + $0x30] sm:$0xf]
        %v331 = vld [vmem:[#allocation5 + $0x34] sm:$0xf]
        %v332 = vld [vmem:[#allocation5 + $0x38] sm:$0xf]
        %v333 = vld [vmem:[#allocation5 + $0x3c] sm:$0xf]
        %v366 = vunpack.c.l.b16 %v286
        %v367 = vunpack.c.l.b16 %v287
        %v368 = vunpack.c.l.b16 %v288
        %v369 = vunpack.c.l.b16 %v289
        %v370 = vunpack.c.l.b16 %v290
        %v371 = vunpack.c.l.b16 %v291
        %v372 = vunpack.c.l.b16 %v292
        %v373 = vunpack.c.l.b16 %v293
        %v374 = vunpack.c.l.b16 %v294
        %v375 = vunpack.c.l.b16 %v295
        %v376 = vunpack.c.l.b16 %v296
        %v377 = vunpack.c.l.b16 %v297
        %v378 = vunpack.c.l.b16 %v298
        %v379 = vunpack.c.l.b16 %v299
        %v380 = vunpack.c.l.b16 %v300
        %v381 = vunpack.c.l.b16 %v301
        %v382 = vunpack.c.l.b16 %v302
        %v383 = vunpack.c.l.b16 %v303
        %v384 = vunpack.c.l.b16 %v304
        %v385 = vunpack.c.l.b16 %v305
        %v386 = vunpack.c.l.b16 %v306
        %v387 = vunpack.c.l.b16 %v307
        %v388 = vunpack.c.l.b16 %v308
        %v389 = vunpack.c.l.b16 %v309
        %v390 = vunpack.c.l.b16 %v310
        %v391 = vunpack.c.l.b16 %v311
        %v392 = vunpack.c.l.b16 %v312
        %v393 = vunpack.c.l.b16 %v313
        %v394 = vunpack.c.l.b16 %v314
        %v395 = vunpack.c.l.b16 %v315
        %v396 = vunpack.c.l.b16 %v316
        %v397 = vunpack.c.l.b16 %v317
        %v398 = vpack.c.b16 %v367, %v366
        %v399 = vpack.c.b16 %v369, %v368
        %v400 = vpack.c.b16 %v371, %v370
        %v401 = vpack.c.b16 %v373, %v372
        %v402 = vpack.c.b16 %v375, %v374
        %v403 = vpack.c.b16 %v377, %v376
        %v404 = vpack.c.b16 %v379, %v378
        %v405 = vpack.c.b16 %v381, %v380
        %v406 = vpack.c.b16 %v383, %v382
        %v407 = vpack.c.b16 %v385, %v384
        %v408 = vpack.c.b16 %v387, %v386
        %v409 = vpack.c.b16 %v389, %v388
        %v410 = vpack.c.b16 %v391, %v390
        %v411 = vpack.c.b16 %v393, %v392
        %v412 = vpack.c.b16 %v395, %v394
        %v413 = vpack.c.b16 %v397, %v396
        %v446 = vunpack.c.l.b16 %v318
        %v447 = vunpack.c.l.b16 %v319
        %v448 = vunpack.c.l.b16 %v320
        %v449 = vunpack.c.l.b16 %v321
        %v450 = vunpack.c.l.b16 %v322
        %v451 = vunpack.c.l.b16 %v323
        %v452 = vunpack.c.l.b16 %v324
        %v453 = vunpack.c.l.b16 %v325
        %v454 = vunpack.c.l.b16 %v326
        %v455 = vunpack.c.l.b16 %v327
        %v456 = vunpack.c.l.b16 %v328
        %v457 = vunpack.c.l.b16 %v329
        %v458 = vunpack.c.l.b16 %v330
        %v459 = vunpack.c.l.b16 %v331
        %v460 = vunpack.c.l.b16 %v332
        %v461 = vunpack.c.l.b16 %v333
        %v462 = vpack.c.b16 %v447, %v446
        %v463 = vpack.c.b16 %v449, %v448
        %v464 = vpack.c.b16 %v451, %v450
        %v465 = vpack.c.b16 %v453, %v452
        %v466 = vpack.c.b16 %v455, %v454
        %v467 = vpack.c.b16 %v457, %v456
        %v468 = vpack.c.b16 %v459, %v458
        %v469 = vpack.c.b16 %v461, %v460
        %478 = vmatpush.bf16.msra.mxu0 %v469
        %479 = vmatpush.bf16.msra.mxu0 %v468
        %480 = vmatpush.bf16.msra.mxu0 %v467
        %481 = vmatpush.bf16.msra.mxu0 %v466
        %482 = vmatpush.bf16.msra.mxu0 %v465
        %483 = vmatpush.bf16.msra.mxu0 %v464
        %484 = vmatpush.bf16.msra.mxu0 %v463
        %485 = vmatpush.bf16.msra.mxu0 %v462
        %486 = vmatmul.bf16.gmra.mxu0 %v398
        %v487 = vpop.f32.mrf.mxu0
        %v488 = vadd.f32 0.0, %v487
        %v489 = vpop.f32.mrf.mxu0
        %v490 = vadd.f32 0.0, %v489
        %491 = vmatmul.bf16.gmra.mxu0 %v399
        %v492 = vpop.f32.mrf.mxu0
        %v493 = vadd.f32 0.0, %v492
        %v494 = vpop.f32.mrf.mxu0
        %v495 = vadd.f32 0.0, %v494
        %496 = vmatmul.bf16.gmra.mxu0 %v400
        %v497 = vpop.f32.mrf.mxu0
        %v498 = vadd.f32 0.0, %v497
        %v499 = vpop.f32.mrf.mxu0
        %v500 = vadd.f32 0.0, %v499
        %501 = vmatmul.bf16.gmra.mxu0 %v401
        %v502 = vpop.f32.mrf.mxu0
        %v503 = vadd.f32 0.0, %v502
        %v504 = vpop.f32.mrf.mxu0
        %v505 = vadd.f32 0.0, %v504
        %506 = vmatmul.bf16.gmra.mxu0 %v402
        %v507 = vpop.f32.mrf.mxu0
        %v508 = vadd.f32 0.0, %v507
        %v509 = vpop.f32.mrf.mxu0
        %v510 = vadd.f32 0.0, %v509
        %511 = vmatmul.bf16.gmra.mxu0 %v403
        %v512 = vpop.f32.mrf.mxu0
        %v513 = vadd.f32 0.0, %v512
        %v514 = vpop.f32.mrf.mxu0
        %v515 = vadd.f32 0.0, %v514
        %516 = vmatmul.bf16.gmra.mxu0 %v404
        %v517 = vpop.f32.mrf.mxu0
        %v518 = vadd.f32 0.0, %v517
        %v519 = vpop.f32.mrf.mxu0
        %v520 = vadd.f32 0.0, %v519
        %521 = vmatmul.bf16.gmra.mxu0 %v405
        %v522 = vpop.f32.mrf.mxu0
        %v523 = vadd.f32 0.0, %v522
        %v524 = vpop.f32.mrf.mxu0
        %v525 = vadd.f32 0.0, %v524
        %526 = vmatmul.bf16.gmra.mxu0 %v406
        %v527 = vpop.f32.mrf.mxu0
        %v528 = vadd.f32 0.0, %v527
        %v529 = vpop.f32.mrf.mxu0
        %v530 = vadd.f32 0.0, %v529
        %531 = vmatmul.bf16.gmra.mxu0 %v407
        %v532 = vpop.f32.mrf.mxu0
        %v533 = vadd.f32 0.0, %v532
        %v534 = vpop.f32.mrf.mxu0
        %v535 = vadd.f32 0.0, %v534
        %536 = vmatmul.bf16.gmra.mxu0 %v408
        %v537 = vpop.f32.mrf.mxu0
        %v538 = vadd.f32 0.0, %v537
        %v539 = vpop.f32.mrf.mxu0
        %v540 = vadd.f32 0.0, %v539
        %541 = vmatmul.bf16.gmra.mxu0 %v409
        %v542 = vpop.f32.mrf.mxu0
        %v543 = vadd.f32 0.0, %v542
        %v544 = vpop.f32.mrf.mxu0
        %v545 = vadd.f32 0.0, %v544
        %546 = vmatmul.bf16.gmra.mxu0 %v410
        %v547 = vpop.f32.mrf.mxu0
        %v548 = vadd.f32 0.0, %v547
        %v549 = vpop.f32.mrf.mxu0
        %v550 = vadd.f32 0.0, %v549
        %551 = vmatmul.bf16.gmra.mxu0 %v411
        %v552 = vpop.f32.mrf.mxu0
        %v553 = vadd.f32 0.0, %v552
        %v554 = vpop.f32.mrf.mxu0
        %v555 = vadd.f32 0.0, %v554
        %556 = vmatmul.bf16.gmra.mxu0 %v412
        %v557 = vpop.f32.mrf.mxu0
        %v558 = vadd.f32 0.0, %v557
        %v559 = vpop.f32.mrf.mxu0
        %v560 = vadd.f32 0.0, %v559
        %561 = vmatmul.bf16.gmra.mxu0 %v413
        %v562 = vpop.f32.mrf.mxu0
        %v563 = vadd.f32 0.0, %v562
        %v564 = vpop.f32.mrf.mxu0
        %v565 = vadd.f32 0.0, %v564
        %566 = vdwg.mxu0
        %v567 = vld [vmem:[%s281] sm:$0x1]
        %v569 = vperm.slane %v567, 0
        %v571 = vmul.f32 %v488, %v569
        %v572 = vmul.f32 %v490, %v569
        %v573 = vmul.f32 %v493, %v569
        %v574 = vmul.f32 %v495, %v569
        %v575 = vmul.f32 %v498, %v569
        %v576 = vmul.f32 %v500, %v569
        %v577 = vmul.f32 %v503, %v569
        %v578 = vmul.f32 %v505, %v569
        %v579 = vmul.f32 %v508, %v569
        %v580 = vmul.f32 %v510, %v569
        %v581 = vmul.f32 %v513, %v569
        %v582 = vmul.f32 %v515, %v569
        %v583 = vmul.f32 %v518, %v569
        %v584 = vmul.f32 %v520, %v569
        %v585 = vmul.f32 %v523, %v569
        %v586 = vmul.f32 %v525, %v569
        %v587 = vmul.f32 %v528, %v569
        %v588 = vmul.f32 %v530, %v569
        %v589 = vmul.f32 %v533, %v569
        %v590 = vmul.f32 %v535, %v569
        %v591 = vmul.f32 %v538, %v569
        %v592 = vmul.f32 %v540, %v569
        %v593 = vmul.f32 %v543, %v569
        %v594 = vmul.f32 %v545, %v569
        %v595 = vmul.f32 %v548, %v569
        %v596 = vmul.f32 %v550, %v569
        %v597 = vmul.f32 %v553, %v569
        %v598 = vmul.f32 %v555, %v569
        %v599 = vmul.f32 %v558, %v569
        %v600 = vmul.f32 %v560, %v569
        %v601 = vmul.f32 %v563, %v569
        %v602 = vmul.f32 %v565, %v569
        %v603 = vld [vmem:[%s284] sm:$0x1]
        %v605 = vperm.slane %v603, 0
        %v607 = vadd.f32 %v571, %v605
        %v608 = vadd.f32 %v572, %v605
        %v609 = vadd.f32 %v573, %v605
        %v610 = vadd.f32 %v574, %v605
        %v611 = vadd.f32 %v575, %v605
        %v612 = vadd.f32 %v576, %v605
        %v613 = vadd.f32 %v577, %v605
        %v614 = vadd.f32 %v578, %v605
        %v615 = vadd.f32 %v579, %v605
        %v616 = vadd.f32 %v580, %v605
        %v617 = vadd.f32 %v581, %v605
        %v618 = vadd.f32 %v582, %v605
        %v619 = vadd.f32 %v583, %v605
        %v620 = vadd.f32 %v584, %v605
        %v621 = vadd.f32 %v585, %v605
        %v622 = vadd.f32 %v586, %v605
        %v623 = vadd.f32 %v587, %v605
        %v624 = vadd.f32 %v588, %v605
        %v625 = vadd.f32 %v589, %v605
        %v626 = vadd.f32 %v590, %v605
        %v627 = vadd.f32 %v591, %v605
        %v628 = vadd.f32 %v592, %v605
        %v629 = vadd.f32 %v593, %v605
        %v630 = vadd.f32 %v594, %v605
        %v631 = vadd.f32 %v595, %v605
        %v632 = vadd.f32 %v596, %v605
        %v633 = vadd.f32 %v597, %v605
        %v634 = vadd.f32 %v598, %v605
        %v635 = vadd.f32 %v599, %v605
        %v636 = vadd.f32 %v600, %v605
        %v637 = vadd.f32 %v601, %v605
        %v638 = vadd.f32 %v602, %v605
        %v639 = vmax.f32 %v607, 0.0
        %v640 = vmax.f32 %v608, 0.0
        %v641 = vmax.f32 %v609, 0.0
        %v642 = vmax.f32 %v610, 0.0
        %v643 = vmax.f32 %v611, 0.0
        %v644 = vmax.f32 %v612, 0.0
        %v645 = vmax.f32 %v613, 0.0
        %v646 = vmax.f32 %v614, 0.0
        %v647 = vmax.f32 %v615, 0.0
        %v648 = vmax.f32 %v616, 0.0
        %v649 = vmax.f32 %v617, 0.0
        %v650 = vmax.f32 %v618, 0.0
        %v651 = vmax.f32 %v619, 0.0
        %v652 = vmax.f32 %v620, 0.0
        %v653 = vmax.f32 %v621, 0.0
        %v654 = vmax.f32 %v622, 0.0
        %v655 = vmax.f32 %v623, 0.0
        %v656 = vmax.f32 %v624, 0.0
        %v657 = vmax.f32 %v625, 0.0
        %v658 = vmax.f32 %v626, 0.0
        %v659 = vmax.f32 %v627, 0.0
        %v660 = vmax.f32 %v628, 0.0
        %v661 = vmax.f32 %v629, 0.0
        %v662 = vmax.f32 %v630, 0.0
        %v663 = vmax.f32 %v631, 0.0
        %v664 = vmax.f32 %v632, 0.0
        %v665 = vmax.f32 %v633, 0.0
        %v666 = vmax.f32 %v634, 0.0
        %v667 = vmax.f32 %v635, 0.0
        %v668 = vmax.f32 %v636, 0.0
        %v669 = vmax.f32 %v637, 0.0
        %v670 = vmax.f32 %v638, 0.0
        %671 = vst [vmem:[%s277] sm:$0xff] %v639
        %672 = vst [vmem:[%s277 + $0x8] sm:$0xff] %v640
        %673 = vst [vmem:[%s277 + $0x10] sm:$0xff] %v641
        %674 = vst [vmem:[%s277 + $0x18] sm:$0xff] %v642
        %675 = vst [vmem:[%s277 + $0x20] sm:$0xff] %v643
        %676 = vst [vmem:[%s277 + $0x28] sm:$0xff] %v644
        %677 = vst [vmem:[%s277 + $0x30] sm:$0xff] %v645
        %678 = vst [vmem:[%s277 + $0x38] sm:$0xff] %v646
        %679 = vst [vmem:[%s277 + $0x40] sm:$0xff] %v647
        %680 = vst [vmem:[%s277 + $0x48] sm:$0xff] %v648
        %681 = vst [vmem:[%s277 + $0x50] sm:$0xff] %v649
        %682 = vst [vmem:[%s277 + $0x58] sm:$0xff] %v650
        %683 = vst [vmem:[%s277 + $0x60] sm:$0xff] %v651
        %684 = vst [vmem:[%s277 + $0x68] sm:$0xff] %v652
        %685 = vst [vmem:[%s277 + $0x70] sm:$0xff] %v653
        %686 = vst [vmem:[%s277 + $0x78] sm:$0xff] %v654
        %687 = vst [vmem:[%s277 + $0x80] sm:$0xff] %v655
        %688 = vst [vmem:[%s277 + $0x88] sm:$0xff] %v656
        %689 = vst [vmem:[%s277 + $0x90] sm:$0xff] %v657
        %690 = vst [vmem:[%s277 + $0x98] sm:$0xff] %v658
        %691 = vst [vmem:[%s277 + $0xa0] sm:$0xff] %v659
        %692 = vst [vmem:[%s277 + $0xa8] sm:$0xff] %v660
        %693 = vst [vmem:[%s277 + $0xb0] sm:$0xff] %v661
        %694 = vst [vmem:[%s277 + $0xb8] sm:$0xff] %v662
        %695 = vst [vmem:[%s277 + $0xc0] sm:$0xff] %v663
        %696 = vst [vmem:[%s277 + $0xc8] sm:$0xff] %v664
        %697 = vst [vmem:[%s277 + $0xd0] sm:$0xff] %v665
        %698 = vst [vmem:[%s277 + $0xd8] sm:$0xff] %v666
        %699 = vst [vmem:[%s277 + $0xe0] sm:$0xff] %v667
        %700 = vst [vmem:[%s277 + $0xe8] sm:$0xff] %v668
        %701 = vst [vmem:[%s277 + $0xf0] sm:$0xff] %v669
        %702 = vst [vmem:[%s277 + $0xf8] sm:$0xff] %v670
        %s703 = sand.u32 %s148, 1
        %s704 = scalar_lea.sflag [#allocation4], %s703
        %s705 = sand.u32 %s148, 1
        %s706 = smul.addr %s705, 256
        %s707 = scalar_lea.vmem [#allocation7], %s706
        // Predicated region
        $region45: #{tpu_custom_call.1} parent=35 // pred_check
          %p708 = pneg %p158
        $region46: #{tpu_custom_call.1} parent=35 // pred_check_branch
          %710 = sbr.rel (%p708) target = $region48
        $region47: #{tpu_custom_call.1} parent=35 // pred_region
          %s711 = smul.u32 32, %s26
          %713 = vsyncadd %s704, 0
          %s714 = sadd.s32 %s27, %s711
          %s715 = smul.addr %s714, 8
          %s716 = scalar_lea.hbm %s4, %s715
          %s717 = sshll.u32 %s707, 4
          %s718 = int_to_ptr.vmem [resolvable:$true] %s717
          %s719 = sshll.u32 %s716, 4
          %s720 = int_to_ptr.hbm [resolvable:$true] %s719
          %725 = dma.vmem_to_hbm [thread:$0]  %s718, 4096, %s720, %s704, 128, 128, 8
        $region48: #{tpu_custom_call.1} parent=35 // pred_fallthru
          _
      $region36: #{tpu_custom_call.1} parent=5 // pred_fallthru
        _
      %p726 = scmp.le.s32.totalorder 2, %s17
      // Predicated region
      $region49: #{tpu_custom_call.1} parent=5 // pred_check
        %p727 = pneg %p726
      $region50: #{tpu_custom_call.1} parent=5 // pred_check_branch
        %729 = sbr.rel (%p727) target = $region52
      $region51: #{tpu_custom_call.1} parent=5 // pred_region
        %s730 = ssub.s32 %s17, 2
        // Predicated region
        $region53: #{tpu_custom_call.1} parent=51 // pred_check
          %p731 = pneg %p164
        $region54: #{tpu_custom_call.1} parent=51 // pred_check_branch
          %733 = sbr.rel (%p731) target = $region56
        $region55: #{tpu_custom_call.1} parent=51 // pred_region
          %s734 = sand.u32 %s149, 1
          %s735 = scalar_lea.sflag [#allocation4], %s734
          %s736 = sand.u32 %s149, 1
          %s737 = smul.addr %s736, 256
          %s738 = scalar_lea.vmem [#allocation7], %s737
          %740 = dma.done %s735, 4096
        $region56: #{tpu_custom_call.1} parent=51 // pred_fallthru
          _
      $region52: #{tpu_custom_call.1} parent=5 // pred_fallthru
        _
    $region6: #{tpu_custom_call.1} parent=1 // loop_footer
      %s21 = sadd.s32 1, %s17
    $region7: #{tpu_custom_call.1} parent=1 // loop_footer_branch
      %16 = sbr.rel target = $region3
    $region8: #{tpu_custom_call.1} parent=1 // loop_exit
      _
    %741 = vsyncpa [#allocation3], 1
    %s742 = scalar_lea.sflag [#allocation3], 1
    %743 = vsyncpa %s742, 1
    %744 = vsyncpa [#allocation6], 1
    %745 = vsyncpa [#allocation4], 1
    %s746 = scalar_lea.sflag [#allocation4], 1
    %747 = vsyncpa %s746, 1

</llo_original>
